<compile_context>
chip_gen: v5e
topology: v5e:2x2
jax: 0.10.0
libtpu: 0.0.40
codegen_flags: <defaults>
</compile_context>

<pallas_src>
import functools

import jax
import jax.numpy as jnp
from jax.experimental import pallas as pl
from jax.experimental.pallas import tpu as pltpu


# ----------------------------------------------------------------------------
# Pallas kernel
# ----------------------------------------------------------------------------
def _layer_norm_kernel(x_ref, scale_ref, shift_ref, o_ref, *, eps, n_feat):
    # x_ref: (row_tile, F); scale_ref/shift_ref: (1, F); o_ref: (row_tile, F)
    x = x_ref[...].astype(jnp.float32)

    mean = jnp.mean(x, axis=-1, keepdims=True)                 # (rt, 1)
    xc = x - mean
    # torch.std is unbiased (Bessel correction): divide by (F - 1).
    denom = float(max(n_feat - 1, 1))
    var = jnp.sum(xc * xc, axis=-1, keepdims=True) * (1.0 / denom)
    std = jnp.sqrt(var)
    inv = pl.reciprocal(std + eps, approx=False)               # eps added to std (not var)

    scale = scale_ref[...].astype(jnp.float32)                 # (1, F) broadcasts over rows
    shift = shift_ref[...].astype(jnp.float32)
    y = scale * (xc * inv) + shift
    o_ref[...] = y.astype(o_ref.dtype)


# ----------------------------------------------------------------------------
# Wrapper
# ----------------------------------------------------------------------------
def pallas_layer_norm(x, scale, shift, eps=1e-6, row_tile=256):
    """LayerNorm over the last axis of x, matching the PyTorch module exactly."""
    orig_shape = x.shape
    F = orig_shape[-1]
    x2 = x.reshape(-1, F)
    R = x2.shape[0]

    if R <= row_tile:
        # Single block covering the full row extent (no divisibility constraint
        # when the block equals the full array dim).
        tr = R
        rp = R
    else:
        tr = row_tile                                   # multiple of 8
        rp = ((R + tr - 1) // tr) * tr
        if rp != R:
            # Zero padding is safe: padded rows give std=0 -> 0/(0+eps)=0, and
            # they are sliced off below.
            x2 = jnp.pad(x2, ((0, rp - R), (0, 0)))

    scale2 = scale.reshape(1, F).astype(x.dtype)
    shift2 = shift.reshape(1, F).astype(x.dtype)

    grid = (rp // tr,)
    out = pl.pallas_call(
        functools.partial(_layer_norm_kernel, eps=float(eps), n_feat=F),
        out_shape=jax.ShapeDtypeStruct((rp, F), x.dtype),
        grid=grid,
        in_specs=[
            pl.BlockSpec((tr, F), lambda i: (i, 0)),
            pl.BlockSpec((1, F), lambda i: (0, 0)),
            pl.BlockSpec((1, F), lambda i: (0, 0)),
        ],
        out_specs=pl.BlockSpec((tr, F), lambda i: (i, 0)),
        compiler_params=pltpu.CompilerParams(
            dimension_semantics=("parallel",),
        ),
    )(x2, scale2, shift2)

    if rp != R:
        out = out[:R]
    return out.reshape(orig_shape)


# ----------------------------------------------------------------------------
# Pure-JAX reference (mirrors the PyTorch module) for a correctness check
# ----------------------------------------------------------------------------
def layer_norm_ref(x, scale, shift, eps=1e-6):
    x32 = x.astype(jnp.float32)
    mean = jnp.mean(x32, axis=-1, keepdims=True)
    var = jnp.sum((x32 - mean) ** 2, axis=-1, keepdims=True) / (x.shape[-1] - 1)
    std = jnp.sqrt(var)
    y = scale.astype(jnp.float32) * (x32 - mean) / (std + eps) + shift.astype(jnp.float32)
    return y.astype(x.dtype)


# ----------------------------------------------------------------------------
# Demo
# ----------------------------------------------------------------------------
if __name__ == "__main__":
    # Small shapes consistent with the module: (batch, seq, features).
    # features=128 keeps the lane axis dense (multiple of 128).
    batch, seq, features = 2, 8, 128
    eps = 1e-6

    root = jax.random.PRNGKey(0)
    k_x, k_scale, k_shift = jax.random.split(root, 3)

    x = jax.random.normal(k_x, (batch, seq, features), jnp.float32)
    # Module inits scale=ones, shift=zeros; perturb them slightly so the
    # affine path is actually exercised.
    scale = jnp.ones((features,), jnp.float32) + 0.1 * jax.random.normal(
        k_scale, (features,), jnp.float32)
    shift = 0.1 * jax.random.normal(k_shift, (features,), jnp.float32)

    out = pallas_layer_norm(x, scale, shift, eps=eps)
    out = jax.block_until_ready(out)

    ref = layer_norm_ref(x, scale, shift, eps=eps)

    assert out.shape == (batch, seq, features)
    assert bool(jnp.all(jnp.isfinite(out)))
    assert bool(jnp.allclose(out, ref, atol=1e-5, rtol=1e-5)), "mismatch vs reference"
    print("KERNEL_OK")
</pallas_src>

<mosaic_0001>
module attributes {stable_mosaic.version = 11 : i64} {
  func.func @_layer_norm_kernel(%arg0: i32, %arg1: memref<16x128xf32, #tpu.memory_space<vmem>>, %arg2: memref<1x128xf32, #tpu.memory_space<vmem>>, %arg3: memref<1x128xf32, #tpu.memory_space<vmem>>, %arg4: memref<16x128xf32, #tpu.memory_space<vmem>>) attributes {dimension_semantics = [#tpu.dimension_semantics<parallel>], iteration_bounds = array<i64: 1>, scalar_prefetch = 0 : i64, scratch_operands = 0 : i64, tpu.core_type = #tpu.core_type<tc>, window_params = [{transform_indices = @transform_0, window_bounds = array<i64: 16, 128>}, {pipeline_mode = #tpu.pipeline_mode<synchronous>, transform_indices = @transform_1, window_bounds = array<i64: 1, 128>}, {pipeline_mode = #tpu.pipeline_mode<synchronous>, transform_indices = @transform_2, window_bounds = array<i64: 1, 128>}, {transform_indices = @transform_3, window_bounds = array<i64: 16, 128>}]} {
    %c0 = arith.constant 0 : index
    %c0_0 = arith.constant 0 : index
    %0 = vector.load %arg1[%c0, %c0_0] : memref<16x128xf32, #tpu.memory_space<vmem>>, vector<16x128xf32>
    %cst = arith.constant dense<0.000000e+00> : vector<16xf32>
    %1 = vector.multi_reduction <add>, %0, %cst [1] : vector<16x128xf32> to vector<16xf32>
    %2 = vector.shape_cast %1 : vector<16xf32> to vector<16x1xf32>
    %cst_1 = arith.constant 1.280000e+02 : f32
    %3 = vector.broadcast %cst_1 : f32 to vector<16x1xf32>
    %4 = arith.divf %2, %3 : vector<16x1xf32>
    %5 = vector.broadcast %4 : vector<16x1xf32> to vector<16x128xf32>
    %6 = arith.subf %0, %5 : vector<16x128xf32>
    %7 = arith.mulf %6, %6 : vector<16x128xf32>
    %cst_2 = arith.constant dense<0.000000e+00> : vector<16xf32>
    %8 = vector.multi_reduction <add>, %7, %cst_2 [1] : vector<16x128xf32> to vector<16xf32>
    %9 = vector.shape_cast %8 : vector<16xf32> to vector<16x1xf32>
    %cst_3 = arith.constant 0.00787401571 : f32
    %10 = vector.broadcast %cst_3 : f32 to vector<16x1xf32>
    %11 = arith.mulf %9, %10 : vector<16x1xf32>
    %12 = math.sqrt %11 : vector<16x1xf32>
    %cst_4 = arith.constant 9.99999997E-7 : f32
    %13 = vector.broadcast %cst_4 : f32 to vector<16x1xf32>
    %14 = arith.addf %12, %13 : vector<16x1xf32>
    %15 = tpu.reciprocal %14 : vector<16x1xf32> -> vector<16x1xf32>
    %c0_5 = arith.constant 0 : index
    %c0_6 = arith.constant 0 : index
    %16 = vector.load %arg2[%c0_5, %c0_6] : memref<1x128xf32, #tpu.memory_space<vmem>>, vector<1x128xf32>
    %c0_7 = arith.constant 0 : index
    %c0_8 = arith.constant 0 : index
    %17 = vector.load %arg3[%c0_7, %c0_8] : memref<1x128xf32, #tpu.memory_space<vmem>>, vector<1x128xf32>
    %18 = vector.broadcast %15 : vector<16x1xf32> to vector<16x128xf32>
    %19 = arith.mulf %6, %18 : vector<16x128xf32>
    %20 = vector.broadcast %16 : vector<1x128xf32> to vector<16x128xf32>
    %21 = arith.mulf %20, %19 : vector<16x128xf32>
    %22 = vector.broadcast %17 : vector<1x128xf32> to vector<16x128xf32>
    %23 = arith.addf %21, %22 : vector<16x128xf32>
    %c0_9 = arith.constant 0 : index
    %c0_10 = arith.constant 0 : index
    %24 = vector.load %arg4[%c0_9, %c0_10] : memref<16x128xf32, #tpu.memory_space<vmem>>, vector<16x128xf32>
    tpu.vector_store %arg4[%c0_9, %c0_10], %23 {strides = array<i32>} : memref<16x128xf32, #tpu.memory_space<vmem>>, vector<16x128xf32>,
    return
  }
  func.func @transform_0(%arg0: i32) -> (i32, i32) {
    %c0_i32 = arith.constant 0 : i32
    %c0_i32_0 = arith.constant 0 : i32
    return %arg0, %c0_i32 : i32, i32
  }
  func.func @transform_1(%arg0: i32) -> (i32, i32) {
    %c0_i32 = arith.constant 0 : i32
    %c0_i32_0 = arith.constant 0 : i32
    %c0_i32_1 = arith.constant 0 : i32
    return %c0_i32, %c0_i32_0 : i32, i32
  }
  func.func @transform_2(%arg0: i32) -> (i32, i32) {
    %c0_i32 = arith.constant 0 : i32
    %c0_i32_0 = arith.constant 0 : i32
    %c0_i32_1 = arith.constant 0 : i32
    return %c0_i32, %c0_i32_0 : i32, i32
  }
  func.func @transform_3(%arg0: i32) -> (i32, i32) {
    %c0_i32 = arith.constant 0 : i32
    %c0_i32_0 = arith.constant 0 : i32
    return %arg0, %c0_i32 : i32, i32
  }
}

</mosaic_0001>

<llo_original>
// kernel: tpu_custom_call.1
$region0: #{tpu_custom_call.1}
  #allocation0 [shape = 'u32[]', space=smem, size = 0x4, offset = 0x4, fixed_abs, tag = 'smem constant byte address 0x4 - core index']
  #allocation1 [shape = 'u32[72,128]{1,0:T(1,128)}', space=vmem, size = 0x9000, scoped, tag = 'internal scratch']
  %s0 = inlined_call_operand.hbm [shape: f32[16,128], index: 0, kind: input, shape index: {}]
  %s1 = inlined_call_operand.hbm [shape: f32[1,128], index: 1, kind: input, shape index: {}]
  %s2 = inlined_call_operand.vmem [shape: f32[1,128], index: 2, kind: input, shape index: {}]
  %s3 = inlined_call_operand.hbm [shape: f32[16,128], index: 3, kind: output, shape index: {}]
  %s4 = sld [smem:[#allocation0]]
  $region30: #{tpu_custom_call.1} parent=0
    _
  %s6 = ssub.s32 1, %s4
  %s7 = scalar_select 0, %s6, %s4
  $region1: #{tpu_custom_call.1} parent=0
    #allocation2 [shape = 'u8[8192]{0}', space=vmem, size = 0x2000, scoped, tag = 'input window, operand 0, single buffered']
    #allocation3 [shape = 's32[1]{0}', space=sflag, size = 0x4, scoped, tag = 'scoped memory for tpu_custom_call.1']
    #allocation4 [shape = 's32[1]{0}', space=sflag, size = 0x4, scoped, tag = 'scoped memory for tpu_custom_call.1']
    #allocation5 [shape = 'u8[512]{0}', space=vmem, size = 0x400, scoped, tag = 'input window, operand 1, single buffered']
    #allocation6 [shape = 's32[1]{0}', space=sflag, size = 0x4, scoped, tag = 'scoped memory for tpu_custom_call.1']
    #allocation7 [shape = 'u8[8192]{0}', space=vmem, size = 0x2000, scoped, tag = 'output window, operand 0, single buffered']
    %8 = vsyncpa [#allocation3], 0
    %9 = vsyncpa [#allocation6], 0
    %10 = vsyncpa [#allocation4], 0
    // Predicated region
    $region2: #{tpu_custom_call.1} parent=1 // pred_check
      _
    $region3: #{tpu_custom_call.1} parent=1 // pred_check_branch
      %12 = sbr.rel (0) target = $region5
    $region4: #{tpu_custom_call.1} parent=1 // pred_region
      %14 = vsyncadd [#allocation3], 0
      %s15 = sshll.u32 %s0, 4
      %s16 = int_to_ptr.hbm [resolvable:$true] %s15
      %s17 = sshll.u32 [#allocation2], 4
      %s18 = int_to_ptr.vmem [resolvable:$true] %s17
      %23 = dma.hbm_to_vmem [thread:$0]  %s16, 256, %s18, [#allocation3], 128, 128, 8
    $region5: #{tpu_custom_call.1} parent=1 // pred_fallthru
      _
    // Predicated region
    $region6: #{tpu_custom_call.1} parent=1 // pred_check
      _
    $region7: #{tpu_custom_call.1} parent=1 // pred_check_branch
      %25 = sbr.rel (0) target = $region9
    $region8: #{tpu_custom_call.1} parent=1 // pred_region
      %27 = vsyncadd [#allocation6], 0
      %s29 = sshll.u32 %s1, 4
      %s30 = int_to_ptr.hbm [resolvable:$true] %s29
      %s31 = sshll.u32 [#allocation5], 4
      %s32 = int_to_ptr.vmem [resolvable:$true] %s31
      %34 = dma.hbm_to_vmem [thread:$0]  %s30, 16, %s32, [#allocation6]
    $region9: #{tpu_custom_call.1} parent=1 // pred_fallthru
      _
    // Predicated region
    $region10: #{tpu_custom_call.1} parent=1 // pred_check
      _
    $region11: #{tpu_custom_call.1} parent=1 // pred_check_branch
      %36 = sbr.rel (0) target = $region13
    $region12: #{tpu_custom_call.1} parent=1 // pred_region
      _
    $region13: #{tpu_custom_call.1} parent=1 // pred_fallthru
      _
    // Predicated region
    $region14: #{tpu_custom_call.1} parent=1 // pred_check
      _
    $region15: #{tpu_custom_call.1} parent=1 // pred_check_branch
      %38 = sbr.rel (0) target = $region17
    $region16: #{tpu_custom_call.1} parent=1 // pred_region
      %40 = dma.done [#allocation3], 256
    $region17: #{tpu_custom_call.1} parent=1 // pred_fallthru
      _
    // Predicated region
    $region18: #{tpu_custom_call.1} parent=1 // pred_check
      _
    $region19: #{tpu_custom_call.1} parent=1 // pred_check_branch
      %42 = sbr.rel (0) target = $region21
    $region20: #{tpu_custom_call.1} parent=1 // pred_region
      %44 = dma.done [#allocation6], 16
    $region21: #{tpu_custom_call.1} parent=1 // pred_fallthru
      _
    %v45 = vld [vmem:[#allocation2] sm:$0xff]
    %v46 = vld [vmem:[#allocation2 + $0x8] sm:$0xff]
    %47 = vadd.xlane.f32.xlu0 %v45
    %v48 = vpop.xlane.xlu0 %47
    %49 = vadd.xlane.f32.xlu0 %v46
    %v50 = vpop.xlane.xlu0 %49
    %v51 = vrcp.pop 128.0
    %v52 = vmul.f32 128.0, %v51
    %v53 = vsub.f32 1.0, %v52
    %v54 = vmul.f32 %v51, %v53
    %v55 = vadd.f32 %v51, %v54
    %vm56 = vweird.f32 %v51
    %v57 = vsel %vm56, %v51, %v55
    %v58 = vmul.f32 %v48, %v57
    %v59 = vmul.f32 %v50, %v57
    %v60 = vsub.f32 %v45, %v58
    %v61 = vsub.f32 %v46, %v59
    %v62 = vmul.f32 %v60, %v60
    %v63 = vmul.f32 %v61, %v61
    %64 = vadd.xlane.f32.xlu0 %v62
    %v65 = vpop.xlane.xlu0 %64
    %66 = vadd.xlane.f32.xlu0 %v63
    %v67 = vpop.xlane.xlu0 %66
    %v68 = vmul.f32 %v65, 0.007874016
    %v69 = vmul.f32 %v67, 0.007874016
    %v70 = vrsqrt.pop %v68
    %v71 = vmul.f32 %v70, %v68
    %v72 = vmul.f32 %v71, %v70
    %v73 = vmul.f32 0.5, %v72
    %v74 = vsub.f32 1.5, %v73
    %v75 = vmul.f32 %v70, %v74
    %v76 = vmul.f32 %v68, %v75
    %vm77 = vcmp.eq.f32.partialorder %v68, inf
    %v78 = vsel %vm77, %v68, %v76
    %vm79 = vcmp.eq.f32.partialorder %v68, 0.0
    %v80 = vand.u32 %v68, 2147483648
    %v81 = vsel %vm79, %v80, %v78
    %v82 = vrsqrt.pop %v69
    %v83 = vmul.f32 %v82, %v69
    %v84 = vmul.f32 %v83, %v82
    %v85 = vmul.f32 0.5, %v84
    %v86 = vsub.f32 1.5, %v85
    %v87 = vmul.f32 %v82, %v86
    %v88 = vmul.f32 %v69, %v87
    %vm89 = vcmp.eq.f32.partialorder %v69, inf
    %v90 = vsel %vm89, %v69, %v88
    %vm91 = vcmp.eq.f32.partialorder %v69, 0.0
    %v92 = vand.u32 %v69, 2147483648
    %v93 = vsel %vm91, %v92, %v90
    %v94 = vadd.f32 %v81, 1e-06
    %v95 = vadd.f32 %v93, 1e-06
    %v96 = vrcp.pop %v94
    %v97 = vmul.f32 %v94, %v96
    %v98 = vsub.f32 1.0, %v97
    %v99 = vmul.f32 %v96, %v98
    %v100 = vadd.f32 %v96, %v99
    %vm101 = vweird.f32 %v94
    %vm102 = vweird.f32 %v96
    %vm103 = vmor %vm101, %vm102
    %v104 = vsel %vm103, %v96, %v100
    %v105 = vand.u32 2147483647, %v94
    %vm106 = vcmp.eq.f32.partialorder %v105, 8.507059e+37
    %v107 = vand.u32 %v94, 2147483648
    %v108 = vor.u32 1.1754944e-38, %v107
    %v109 = vsel %vm106, %v108, %v104
    %v110 = vrcp.pop %v95
    %v111 = vmul.f32 %v95, %v110
    %v112 = vsub.f32 1.0, %v111
    %v113 = vmul.f32 %v110, %v112
    %v114 = vadd.f32 %v110, %v113
    %vm115 = vweird.f32 %v95
    %vm116 = vweird.f32 %v110
    %vm117 = vmor %vm115, %vm116
    %v118 = vsel %vm117, %v110, %v114
    %v119 = vand.u32 2147483647, %v95
    %vm120 = vcmp.eq.f32.partialorder %v119, 8.507059e+37
    %v121 = vand.u32 %v95, 2147483648
    %v122 = vor.u32 1.1754944e-38, %v121
    %v123 = vsel %vm120, %v122, %v118
    %v124 = vld [vmem:[#allocation5] sm:$0x1]
    %v125 = vld [vmem:[%s2] sm:$0x1]
    %v126 = vmul.f32 %v60, %v109
    %v127 = vmul.f32 %v61, %v123
    %v129 = vperm.slane %v124, 0
    %v131 = vmul.f32 %v129, %v126
    %v132 = vmul.f32 %v129, %v127
    %v134 = vperm.slane %v125, 0
    %v136 = vadd.f32 %v131, %v134
    %v137 = vadd.f32 %v132, %v134
    %138 = vst [vmem:[#allocation7] sm:$0xff] %v136
    %139 = vst [vmem:[#allocation7 + $0x8] sm:$0xff] %v137
    // Predicated region
    $region22: #{tpu_custom_call.1} parent=1 // pred_check
      _
    $region23: #{tpu_custom_call.1} parent=1 // pred_check_branch
      %141 = sbr.rel (0) target = $region25
    $region24: #{tpu_custom_call.1} parent=1 // pred_region
      %143 = vsyncadd [#allocation4], 0
      %s144 = sshll.u32 [#allocation7], 4
      %s145 = int_to_ptr.vmem [resolvable:$true] %s144
      %s146 = sshll.u32 %s3, 4
      %s147 = int_to_ptr.hbm [resolvable:$true] %s146
      %152 = dma.vmem_to_hbm [thread:$0]  %s145, 256, %s147, [#allocation4], 128, 128, 8
    $region25: #{tpu_custom_call.1} parent=1 // pred_fallthru
      _
    // Predicated region
    $region26: #{tpu_custom_call.1} parent=1 // pred_check
      _
    $region27: #{tpu_custom_call.1} parent=1 // pred_check_branch
      %154 = sbr.rel (0) target = $region29
    $region28: #{tpu_custom_call.1} parent=1 // pred_region
      %156 = dma.done [#allocation4], 256
    $region29: #{tpu_custom_call.1} parent=1 // pred_fallthru
      _
    %157 = vsyncpa [#allocation3], 1
    %158 = vsyncpa [#allocation6], 1
    %159 = vsyncpa [#allocation4], 1

</llo_original>
